<compile_context>
chip_gen: v7x
topology: tpu7x:2x2x1
jax: 0.10.0
libtpu: 0.0.40
codegen_flags: <defaults>
</compile_context>

<pallas_src>
import functools

import jax
import jax.numpy as jnp
from jax.experimental import pallas as pl
from jax.experimental.pallas import tpu as pltpu


def _round_up(x, m):
    return ((x + m - 1) // m) * m


def _pick_tile_n(n_rows, K, E, vmem_budget_bytes=48 << 20):
    """Largest multiple-of-8 row tile (<=512) that fits the VMEM budget."""
    # Per-row f32 bytes in flight: x + emb + attn slabs (K*E each) + final (E),
    # all double-buffered by the BlockSpec pipeline.
    per_row = (3 * K * E + E) * 4 * 2
    cap = max(8, vmem_budget_bytes // max(per_row, 1))
    tile = min(512, cap, _round_up(n_rows, 8))
    tile = max(8, (tile // 8) * 8)
    return int(tile)


def _meta_emb_kernel(x_ref, w_ref, b_ref, final_ref, emb_ref, attn_ref, *, K, E):
    # x_ref:     (TN, K*E)   gathered word vectors, sources packed along lanes
    # w_ref:     (K*E, K*E)  block-diagonal projection weights (in, out)
    # b_ref:     (1, K*E)    concatenated projection biases
    # final_ref: (TN, E)     attn-weighted sum
    # emb_ref:   (TN, K*E)   projected embeddings, lane-dense slab
    # attn_ref:  (TN, K*E)   softmax(tanh(embedding)) over K, lane-dense slab
    x = x_ref[...]
    emb = jnp.dot(x, w_ref[...], preferred_element_type=jnp.float32) + b_ref[...]
    emb_ref[...] = emb

    # Per-source views (static lane slices) — K is small (2-4).
    embs = [emb[:, k * E:(k + 1) * E] for k in range(K)]
    attn = [jnp.tanh(e) for e in embs]

    # Numerically stable softmax over the K sources.
    m = attn[0]
    for k in range(1, K):
        m = jnp.maximum(m, attn[k])
    exps = [jnp.exp(a - m) for a in attn]
    s = exps[0]
    for k in range(1, K):
        s = s + exps[k]
    inv = pl.reciprocal(s, approx=False)  # exact, to match the f32 reference
    scores = [e_ * inv for e_ in exps]

    final = embs[0] * scores[0]
    for k in range(1, K):
        final = final + embs[k] * scores[k]
    final_ref[...] = final
    attn_ref[...] = jnp.concatenate(scores, axis=-1)


def word_meta_embedding_forward(input_words, emb_tables, proj_w, proj_b, *, tile_n=None):
    """
    input_words: (B, S) int32 token ids
    emb_tables:  (K, V, E) float32 embedding tables
    proj_w:      (K, E, E) float32 Linear weights (PyTorch layout: (out, in))
    proj_b:      (K, E)    float32 Linear biases
    returns (final (B,S,E), embedding (B,S,E,K), attn_scores (B,S,E,K))
    """
    K, V, E = emb_tables.shape
    B, S = input_words.shape
    N = B * S
    KE = K * E

    if tile_n is None:
        tile_n = _pick_tile_n(N, K, E)
    n_pad = _round_up(N, tile_n)

    # --- glue: gather embedding rows (pure lookup) directly into a lane-dense slab ---
    flat_ids = input_words.reshape(-1).astype(jnp.int32)
    if n_pad != N:
        flat_ids = jnp.pad(flat_ids, (0, n_pad - N))  # pad with token 0 (sliced off later)
    gathered = jnp.concatenate(
        [emb_tables[k][flat_ids] for k in range(K)], axis=-1
    ).astype(jnp.float32)                                       # (n_pad, K*E)

    # --- glue: block-diagonal (K*E, K*E) weight so K projections fuse into one matmul ---
    w_t = jnp.transpose(proj_w, (0, 2, 1)).astype(jnp.float32)  # (K, E, E) as (in, out)
    w_bd = jax.scipy.linalg.block_diag(*[w_t[k] for k in range(K)])  # (K*E, K*E)
    b_cat = proj_b.reshape(1, KE).astype(jnp.float32)           # (1, K*E)

    grid = (n_pad // tile_n,)
    kernel = functools.partial(_meta_emb_kernel, K=K, E=E)

    final, emb, attn = pl.pallas_call(
        kernel,
        out_shape=(
            jax.ShapeDtypeStruct((n_pad, E), jnp.float32),
            jax.ShapeDtypeStruct((n_pad, KE), jnp.float32),
            jax.ShapeDtypeStruct((n_pad, KE), jnp.float32),
        ),
        grid_spec=pltpu.PrefetchScalarGridSpec(
            num_scalar_prefetch=0,
            grid=grid,
            in_specs=[
                pl.BlockSpec((tile_n, KE), lambda i: (i, 0)),   # gathered x slab
                pl.BlockSpec((KE, KE), lambda i: (0, 0)),       # block-diag weights
                pl.BlockSpec((1, KE), lambda i: (0, 0)),        # biases
            ],
            out_specs=(
                pl.BlockSpec((tile_n, E), lambda i: (i, 0)),    # final
                pl.BlockSpec((tile_n, KE), lambda i: (i, 0)),   # emb slab
                pl.BlockSpec((tile_n, KE), lambda i: (i, 0)),   # attn slab
            ),
        ),
        compiler_params=pltpu.CompilerParams(
            dimension_semantics=("parallel",),
            vmem_limit_bytes=64 << 20,
        ),
    )(gathered, w_bd, b_cat)

    # --- glue: back to PyTorch output layout (single cheap reshape/transpose) ---
    final_out = final[:N].reshape(B, S, E)
    emb_out = emb[:N].reshape(B, S, K, E).transpose(0, 1, 3, 2)    # (B, S, E, K)
    attn_out = attn[:N].reshape(B, S, K, E).transpose(0, 1, 3, 2)  # (B, S, E, K)
    return final_out, emb_out, attn_out


def _reference(input_words, emb_tables, proj_w, proj_b):
    K = emb_tables.shape[0]
    vecs = []
    for k in range(K):
        x = emb_tables[k][input_words]                 # (B, S, E)
        y = x @ proj_w[k].T + proj_b[k]                # Linear
        vecs.append(y)
    embedding = jnp.stack(vecs, axis=-1)               # (B, S, E, K)
    attn_scores = jax.nn.softmax(jnp.tanh(embedding), axis=-1)
    final = jnp.sum(embedding * attn_scores, axis=-1)
    return final, embedding, attn_scores


if __name__ == "__main__":
    import math

    # small deterministic setup
    B, S, E, K, V = 2, 8, 32, 2, 50
    key = jax.random.PRNGKey(0)
    k_tab, k_w, k_b, k_ids = jax.random.split(key, 4)

    emb_tables = jax.random.normal(k_tab, (K, V, E), dtype=jnp.float32)
    stdv = 1.0 / math.sqrt(E)
    proj_w = jax.random.uniform(k_w, (K, E, E), minval=-stdv, maxval=stdv, dtype=jnp.float32)
    proj_b = jax.random.uniform(k_b, (K, E), minval=-stdv, maxval=stdv, dtype=jnp.float32)
    input_words = jax.random.randint(k_ids, (B, S), 0, V, dtype=jnp.int32)

    final, embedding, attn_scores = word_meta_embedding_forward(
        input_words, emb_tables, proj_w, proj_b
    )
    jax.block_until_ready((final, embedding, attn_scores))

    # correctness check vs pure-JAX reference
    ref_final, ref_emb, ref_attn = _reference(input_words, emb_tables, proj_w, proj_b)
    assert jnp.allclose(final, ref_final, atol=1e-5, rtol=1e-5)
    assert jnp.allclose(embedding, ref_emb, atol=1e-5, rtol=1e-5)
    assert jnp.allclose(attn_scores, ref_attn, atol=1e-5, rtol=1e-5)

    print("KERNEL_OK")
</pallas_src>

<mosaic_0001>
module attributes {stable_mosaic.version = 11 : i64} {
  func.func @_meta_emb_kernel(%arg0: i32, %arg1: memref<16x64xf32, #tpu.memory_space<vmem>>, %arg2: memref<64x64xf32, #tpu.memory_space<vmem>>, %arg3: memref<1x64xf32, #tpu.memory_space<vmem>>, %arg4: memref<16x32xf32, #tpu.memory_space<vmem>>, %arg5: memref<16x64xf32, #tpu.memory_space<vmem>>, %arg6: memref<16x64xf32, #tpu.memory_space<vmem>>) attributes {dimension_semantics = [#tpu.dimension_semantics<parallel>], iteration_bounds = array<i64: 1>, scalar_prefetch = 0 : i64, scratch_operands = 0 : i64, tpu.core_type = #tpu.core_type<tc>, window_params = [{transform_indices = @transform_0, window_bounds = array<i64: 16, 64>}, {pipeline_mode = #tpu.pipeline_mode<synchronous>, transform_indices = @transform_1, window_bounds = array<i64: 64, 64>}, {pipeline_mode = #tpu.pipeline_mode<synchronous>, transform_indices = @transform_2, window_bounds = array<i64: 1, 64>}, {transform_indices = @transform_3, window_bounds = array<i64: 16, 32>}, {transform_indices = @transform_4, window_bounds = array<i64: 16, 64>}, {transform_indices = @transform_5, window_bounds = array<i64: 16, 64>}]} {
    %c0 = arith.constant 0 : index
    %c0_0 = arith.constant 0 : index
    %0 = vector.load %arg1[%c0, %c0_0] : memref<16x64xf32, #tpu.memory_space<vmem>>, vector<16x64xf32>
    %c0_1 = arith.constant 0 : index
    %c0_2 = arith.constant 0 : index
    %1 = vector.load %arg2[%c0_1, %c0_2] : memref<64x64xf32, #tpu.memory_space<vmem>>, vector<64x64xf32>
    %cst = arith.constant dense<0.000000e+00> : vector<16x64xf32>
    %2 = tpu.matmul %0, %1, %cst {dimension_numbers = #tpu.dot_dimension_numbers<[1], [0], [0], [1], [0, 0, 1, 1], [], []>} : vector<16x64xf32>, vector<64x64xf32>, vector<16x64xf32> -> vector<16x64xf32>
    %c0_3 = arith.constant 0 : index
    %c0_4 = arith.constant 0 : index
    %3 = vector.load %arg3[%c0_3, %c0_4] : memref<1x64xf32, #tpu.memory_space<vmem>>, vector<1x64xf32>
    %4 = vector.broadcast %3 : vector<1x64xf32> to vector<16x64xf32>
    %5 = arith.addf %2, %4 : vector<16x64xf32>
    %c0_5 = arith.constant 0 : index
    %c0_6 = arith.constant 0 : index
    %6 = vector.load %arg5[%c0_5, %c0_6] : memref<16x64xf32, #tpu.memory_space<vmem>>, vector<16x64xf32>
    tpu.vector_store %arg5[%c0_5, %c0_6], %5 {strides = array<i32>} : memref<16x64xf32, #tpu.memory_space<vmem>>, vector<16x64xf32>,
    %7 = vector.extract_strided_slice %5 {offsets = [0, 0], sizes = [16, 32], strides = [1, 1]} : vector<16x64xf32> to vector<16x32xf32>
    %8 = vector.extract_strided_slice %5 {offsets = [0, 32], sizes = [16, 32], strides = [1, 1]} : vector<16x64xf32> to vector<16x32xf32>
    %9 = math.tanh %7 : vector<16x32xf32>
    %10 = math.tanh %8 : vector<16x32xf32>
    %11 = arith.maximumf %9, %10 : vector<16x32xf32>
    %12 = arith.subf %9, %11 : vector<16x32xf32>
    %13 = math.exp %12 : vector<16x32xf32>
    %14 = arith.subf %10, %11 : vector<16x32xf32>
    %15 = math.exp %14 : vector<16x32xf32>
    %16 = arith.addf %13, %15 : vector<16x32xf32>
    %17 = tpu.reciprocal %16 : vector<16x32xf32> -> vector<16x32xf32>
    %18 = arith.mulf %13, %17 : vector<16x32xf32>
    %19 = arith.mulf %15, %17 : vector<16x32xf32>
    %20 = arith.mulf %7, %18 : vector<16x32xf32>
    %21 = arith.mulf %8, %19 : vector<16x32xf32>
    %22 = arith.addf %20, %21 : vector<16x32xf32>
    %c0_7 = arith.constant 0 : index
    %c0_8 = arith.constant 0 : index
    %23 = vector.load %arg4[%c0_7, %c0_8] : memref<16x32xf32, #tpu.memory_space<vmem>>, vector<16x32xf32>
    tpu.vector_store %arg4[%c0_7, %c0_8], %22 {strides = array<i32>} : memref<16x32xf32, #tpu.memory_space<vmem>>, vector<16x32xf32>,
    %24 = tpu.concatenate %18, %19 in 1 : vector<16x32xf32>, vector<16x32xf32> -> vector<16x64xf32>
    %c0_9 = arith.constant 0 : index
    %c0_10 = arith.constant 0 : index
    %25 = vector.load %arg6[%c0_9, %c0_10] : memref<16x64xf32, #tpu.memory_space<vmem>>, vector<16x64xf32>
    tpu.vector_store %arg6[%c0_9, %c0_10], %24 {strides = array<i32>} : memref<16x64xf32, #tpu.memory_space<vmem>>, vector<16x64xf32>,
    return
  }
  func.func @transform_0(%arg0: i32) -> (i32, i32) {
    %c0_i32 = arith.constant 0 : i32
    %c0_i32_0 = arith.constant 0 : i32
    return %arg0, %c0_i32 : i32, i32
  }
  func.func @transform_1(%arg0: i32) -> (i32, i32) {
    %c0_i32 = arith.constant 0 : i32
    %c0_i32_0 = arith.constant 0 : i32
    %c0_i32_1 = arith.constant 0 : i32
    return %c0_i32, %c0_i32_0 : i32, i32
  }
  func.func @transform_2(%arg0: i32) -> (i32, i32) {
    %c0_i32 = arith.constant 0 : i32
    %c0_i32_0 = arith.constant 0 : i32
    %c0_i32_1 = arith.constant 0 : i32
    return %c0_i32, %c0_i32_0 : i32, i32
  }
  func.func @transform_3(%arg0: i32) -> (i32, i32) {
    %c0_i32 = arith.constant 0 : i32
    %c0_i32_0 = arith.constant 0 : i32
    return %arg0, %c0_i32 : i32, i32
  }
  func.func @transform_4(%arg0: i32) -> (i32, i32) {
    %c0_i32 = arith.constant 0 : i32
    %c0_i32_0 = arith.constant 0 : i32
    return %arg0, %c0_i32 : i32, i32
  }
  func.func @transform_5(%arg0: i32) -> (i32, i32) {
    %c0_i32 = arith.constant 0 : i32
    %c0_i32_0 = arith.constant 0 : i32
    return %arg0, %c0_i32 : i32, i32
  }
}

</mosaic_0001>

<llo_original>
// kernel: tpu_custom_call.1
$region0: #{tpu_custom_call.1}
  #allocation0 [shape = 'u32[]', space=smem, size = 0x4, offset = 0x4, fixed_abs, tag = 'smem constant byte address 0x4 - core index']
  #allocation1 [shape = 'u32[144,128]{1,0:T(1,128)}', space=vmem, size = 0x12000, scoped, tag = 'internal scratch']
  %s0 = inlined_call_operand.hbm [shape: f32[16,64], index: 0, kind: input, shape index: {}]
  %s1 = inlined_call_operand.hbm [shape: f32[64,64], index: 1, kind: input, shape index: {}]
  %s2 = inlined_call_operand.hbm [shape: f32[1,64], index: 2, kind: input, shape index: {}]
  %s3 = inlined_call_operand.hbm [shape: f32[16,32], index: 3, kind: output, shape index: {0}]
  %s4 = inlined_call_operand.hbm [shape: f32[16,64], index: 4, kind: output, shape index: {1}]
  %s5 = inlined_call_operand.hbm [shape: f32[16,64], index: 5, kind: output, shape index: {2}]
  %6 = xla_tuple %s3, %s4, %s5
  %s7 = sld [smem:[#allocation0]]
  $region50: #{tpu_custom_call.1} parent=0
    _
  %s9 = ssub.s32 1, %s7
  %s10 = scalar_select 0, %s9, %s7
  $region1: #{tpu_custom_call.1} parent=0
    #allocation2 [shape = 'u8[8192]{0}', space=vmem, size = 0x2000, scoped, tag = 'input window, operand 0, single buffered']
    #allocation3 [shape = 's32[1]{0}', space=sflag, size = 0x4, scoped, tag = 'scoped memory for tpu_custom_call.1']
    #allocation4 [shape = 's32[1]{0}', space=sflag, size = 0x4, scoped, tag = 'scoped memory for tpu_custom_call.1']
    #allocation5 [shape = 'u8[32768]{0}', space=vmem, size = 0x8000, scoped, tag = 'input window, operand 1, single buffered']
    #allocation6 [shape = 's32[1]{0}', space=sflag, size = 0x4, scoped, tag = 'scoped memory for tpu_custom_call.1']
    #allocation7 [shape = 'u8[512]{0}', space=vmem, size = 0x400, scoped, tag = 'input window, operand 2, single buffered']
    #allocation8 [shape = 'u8[8192]{0}', space=vmem, size = 0x2000, scoped, tag = 'output window, operand 0, single buffered']
    #allocation9 [shape = 'u8[8192]{0}', space=vmem, size = 0x2000, scoped, tag = 'output window, operand 1, single buffered']
    #allocation10 [shape = 's32[1]{0}', space=sflag, size = 0x4, scoped, tag = 'scoped memory for tpu_custom_call.1']
    #allocation11 [shape = 'u8[8192]{0}', space=vmem, size = 0x2000, scoped, tag = 'output window, operand 2, single buffered']
    %11 = vsyncpa [#allocation3], 0
    %12 = vsyncpa [#allocation6], 0
    %13 = vsyncpa [#allocation4], 0
    %14 = vsyncpa [#allocation10], 0
    // Predicated region
    $region2: #{tpu_custom_call.1} parent=1 // pred_check
      _
    $region3: #{tpu_custom_call.1} parent=1 // pred_check_branch
      %16 = sbr.rel (0) target = $region5
    $region4: #{tpu_custom_call.1} parent=1 // pred_region
      %s18 = ssub.s32 256, 256
      %19 = vsyncadd [#allocation3], %s18
      %s20 = sshll.u32 [#allocation2], 4
      %s21 = int_to_ptr.vmem [resolvable:$true] %s20
      %26 = dma.hbm_to_vmem [thread:$0]  %s0, 256, %s21, [#allocation3], 128, 128, 8
    $region5: #{tpu_custom_call.1} parent=1 // pred_fallthru
      _
    // Predicated region
    $region6: #{tpu_custom_call.1} parent=1 // pred_check
      _
    $region7: #{tpu_custom_call.1} parent=1 // pred_check_branch
      %28 = sbr.rel (0) target = $region9
    $region8: #{tpu_custom_call.1} parent=1 // pred_region
      %s30 = ssub.s32 1024, 1024
      %31 = vsyncadd [#allocation6], %s30
      %s32 = sshll.u32 [#allocation5], 4
      %s33 = int_to_ptr.vmem [resolvable:$true] %s32
      %38 = dma.hbm_to_vmem [thread:$0]  %s1, 1024, %s33, [#allocation6], 128, 128, 8
    $region9: #{tpu_custom_call.1} parent=1 // pred_fallthru
      _
    // Predicated region
    $region10: #{tpu_custom_call.1} parent=1 // pred_check
      _
    $region11: #{tpu_custom_call.1} parent=1 // pred_check_branch
      %40 = sbr.rel (0) target = $region13
    $region12: #{tpu_custom_call.1} parent=1 // pred_region
      %s42 = ssub.s32 16, 16
      %43 = vsyncadd [#allocation6], %s42
      %s45 = sshll.u32 [#allocation7], 4
      %s46 = int_to_ptr.vmem [resolvable:$true] %s45
      %48 = dma.hbm_to_vmem [thread:$0]  %s2, 16, %s46, [#allocation6]
    $region13: #{tpu_custom_call.1} parent=1 // pred_fallthru
      _
    // Predicated region
    $region14: #{tpu_custom_call.1} parent=1 // pred_check
      _
    $region15: #{tpu_custom_call.1} parent=1 // pred_check_branch
      %50 = sbr.rel (0) target = $region17
    $region16: #{tpu_custom_call.1} parent=1 // pred_region
      %51 = dma.done [#allocation3], 256
    $region17: #{tpu_custom_call.1} parent=1 // pred_fallthru
      _
    // Predicated region
    $region18: #{tpu_custom_call.1} parent=1 // pred_check
      _
    $region19: #{tpu_custom_call.1} parent=1 // pred_check_branch
      %53 = sbr.rel (0) target = $region21
    $region20: #{tpu_custom_call.1} parent=1 // pred_region
      %54 = dma.done [#allocation6], 1024
    $region21: #{tpu_custom_call.1} parent=1 // pred_fallthru
      _
    // Predicated region
    $region22: #{tpu_custom_call.1} parent=1 // pred_check
      _
    $region23: #{tpu_custom_call.1} parent=1 // pred_check_branch
      %56 = sbr.rel (0) target = $region25
    $region24: #{tpu_custom_call.1} parent=1 // pred_region
      %57 = dma.done [#allocation6], 16
    $region25: #{tpu_custom_call.1} parent=1 // pred_fallthru
      _
    %v58 = vld [vmem:[#allocation2] sm:$0xff]
    %v59 = vld [vmem:[#allocation2 + $0x8] sm:$0xff]
    %v60 = vld [vmem:[#allocation5] sm:$0xff]
    %v61 = vld [vmem:[#allocation5 + $0x8] sm:$0xff]
    %v62 = vld [vmem:[#allocation5 + $0x10] sm:$0xff]
    %v63 = vld [vmem:[#allocation5 + $0x18] sm:$0xff]
    %v64 = vld [vmem:[#allocation5 + $0x20] sm:$0xff]
    %v65 = vld [vmem:[#allocation5 + $0x28] sm:$0xff]
    %v66 = vld [vmem:[#allocation5 + $0x30] sm:$0xff]
    %v67 = vld [vmem:[#allocation5 + $0x38] sm:$0xff]
    %v68 = vld [vmem:[#allocation7] sm:$0x1]
    %v70 = vlaneseq
    %v71 = vshrl.u32 %v70, 7
    %v72 = vsub.s32 0, %v71
    %v73 = vrot.slane %v68, %v72
    %vm75 = vcmask 523264
    %v77 = vsel %vm75, %v58, 0
    %v80 = vsel %vm75, %v59, 0
    %82 = vmatprep.subr.mxu0 0.0
    %83 = vmatpush1.msra.mxu0 %v60
    %84 = vmatprep.subr.mxu0 0.0
    %85 = vmatpush1.msra.mxu0 %v61
    %86 = vmatprep.subr.mxu0 0.0
    %87 = vmatpush1.msra.mxu0 %v62
    %88 = vmatprep.subr.mxu0 0.0
    %89 = vmatpush1.msra.mxu0 %v63
    %90 = vmatprep.subr.mxu0 0.0
    %91 = vmatpush1.msra.mxu0 %v64
    %92 = vmatprep.subr.mxu0 0.0
    %93 = vmatpush1.msra.mxu0 %v65
    %94 = vmatprep.subr.mxu0 0.0
    %95 = vmatpush1.msra.mxu0 %v66
    %96 = vmatprep.subr.mxu0 0.0
    %97 = vmatpush1.msra.mxu0 %v67
    %98 = vmatprep.subr.mxu0 0.0
    %99 = vmatpush1.msra.mxu0 0.0
    %100 = vmatprep.subr.mxu0 0.0
    %101 = vmatpush1.msra.mxu0 0.0
    %102 = vmatprep.subr.mxu0 0.0
    %103 = vmatpush1.msra.mxu0 0.0
    %104 = vmatprep.subr.mxu0 0.0
    %105 = vmatpush1.msra.mxu0 0.0
    %106 = vmatprep.subr.mxu0 0.0
    %107 = vmatpush1.msra.mxu0 0.0
    %108 = vmatprep.subr.mxu0 0.0
    %109 = vmatpush1.msra.mxu0 0.0
    %110 = vmatprep.subr.mxu0 0.0
    %111 = vmatpush1.msra.mxu0 0.0
    %112 = vmatprep.subr.mxu0 0.0
    %113 = vmatpush1.msra.mxu0 0.0
    %114 = vmatprep.subr.mxu0 0.0
    %115 = vmatpush1.msra.mxu0 0.0
    %116 = vmatprep.subr.mxu0 0.0
    %117 = vmatpush1.msra.mxu0 0.0
    %118 = vmatprep.subr.mxu0 0.0
    %119 = vmatpush1.msra.mxu0 0.0
    %120 = vmatprep.subr.mxu0 0.0
    %121 = vmatpush1.msra.mxu0 0.0
    %122 = vmatprep.subr.mxu0 0.0
    %123 = vmatpush1.msra.mxu0 0.0
    %124 = vmatprep.subr.mxu0 0.0
    %125 = vmatpush1.msra.mxu0 0.0
    %126 = vmatprep.subr.mxu0 0.0
    %127 = vmatpush1.msra.mxu0 0.0
    %128 = vmatprep.subr.mxu0 0.0
    %129 = vmatpush1.msra.mxu0 0.0
    %130 = vmatprep.subr.mxu0 0.0
    %131 = vmatpush1.msra.mxu0 0.0
    %132 = vmatprep.subr.mxu0 0.0
    %133 = vmatpush1.msra.mxu0 0.0
    %134 = vmatprep.subr.mxu0 0.0
    %135 = vmatpush1.msra.mxu0 0.0
    %136 = vmatprep.subr.mxu0 0.0
    %137 = vmatpush1.msra.mxu0 0.0
    %138 = vmatprep.subr.mxu0 0.0
    %139 = vmatpush1.msra.mxu0 0.0
    %140 = vmatprep.subr.mxu0 0.0
    %141 = vmatpush1.msra.mxu0 0.0
    %142 = vmatprep.subr.mxu0 0.0
    %143 = vmatpush1.msra.mxu0 0.0
    %144 = vmatprep.subr.mxu0 0.0
    %145 = vmatpush1.msra.mxu0 0.0
    %146 = vmatprep.mubr.f32.mxu0 0.0
    %147 = vmatmul.mubr.f32.gmra.mrb[0].mxu0 %v77
    %v148 = vpop.f32.mrb[0].mxu0
    %v149 = vadd.f32 %v73, %v148
    %v150 = vpop.f32.mrb[0].mxu0
    %151 = vmatprep.mubr.f32.mxu0 0.0
    %152 = vmatmul.mubr.f32.gmra.mrb[0].mxu0 %v80
    %v153 = vpop.f32.mrb[0].mxu0
    %v154 = vadd.f32 %v73, %v153
    %v155 = vpop.f32.mrb[0].mxu0
    %156 = vdwg.mxu0
    %157 = vst.msk [vmem:[#allocation9] sm:$0xff] %vm75, %v149
    %158 = vst.msk [vmem:[#allocation9 + $0x8] sm:$0xff] %vm75, %v154
    %v159 = vtanh.pop %v149
    %v160 = vtanh.pop %v154
    %163 = vrot.lane.b32.xlu0 %v159, 96
    %v164 = vpop.permute.xlu0 %163
    %165 = vrot.lane.b32.xlu0 %v160, 96
    %v166 = vpop.permute.xlu0 %165
    %v169 = vmax.f32 %v159, %v164
    %v170 = vmax.f32 %v160, %v166
    %v171 = vsub.f32 %v159, %v169
    %v172 = vsub.f32 %v160, %v170
    %v173 = vmul.f32 %v171, 1.442695
    %v174 = vpow.pop %v173
    %v175 = vmul.f32 %v172, 1.442695
    %v176 = vpow.pop %v175
    %179 = vrot.lane.b32.xlu0 %v169, 32
    %v180 = vpop.permute.xlu0 %179
    %181 = vrot.lane.b32.xlu0 %v170, 32
    %v182 = vpop.permute.xlu0 %181
    %v185 = vsub.f32 %v159, %v180
    %v186 = vsub.f32 %v160, %v182
    %v187 = vmul.f32 %v185, 1.442695
    %v188 = vpow.pop %v187
    %v189 = vmul.f32 %v186, 1.442695
    %v190 = vpow.pop %v189
    %193 = vrot.lane.b32.xlu0 %v188, 96
    %v194 = vpop.permute.xlu0 %193
    %195 = vrot.lane.b32.xlu0 %v190, 96
    %v196 = vpop.permute.xlu0 %195
    %v199 = vadd.f32 %v174, %v194
    %v200 = vadd.f32 %v176, %v196
    %v201 = vrcp.pop %v199
    %v202 = vrcp.pop %v200
    %v203 = vmul.f32 %v174, %v201
    %v204 = vmul.f32 %v176, %v202
    %207 = vrot.lane.b32.xlu0 %v201, 32
    %v208 = vpop.permute.xlu0 %207
    %209 = vrot.lane.b32.xlu0 %v202, 32
    %v210 = vpop.permute.xlu0 %209
    %v213 = vmul.f32 %v188, %v208
    %v214 = vmul.f32 %v190, %v210
    %v215 = vmul.f32 %v149, %v203
    %v216 = vmul.f32 %v154, %v204
    %v217 = vmul.f32 %v149, %v213
    %v218 = vmul.f32 %v154, %v214
    %221 = vrot.lane.b32.xlu0 %v217, 96
    %v222 = vpop.permute.xlu0 %221
    %223 = vrot.lane.b32.xlu0 %v218, 96
    %v224 = vpop.permute.xlu0 %223
    %v227 = vadd.f32 %v215, %v222
    %v228 = vadd.f32 %v216, %v224
    %vm229 = vcmask 261120
    %230 = vst.msk [vmem:[#allocation8] sm:$0xff] %vm229, %v227
    %231 = vst.msk [vmem:[#allocation8 + $0x8] sm:$0xff] %vm229, %v228
    %v232 = vsel %vm229, %v203, %v213
    %v233 = vsel %vm229, %v204, %v214
    %234 = vst.msk [vmem:[#allocation11] sm:$0xff] %vm75, %v232
    %235 = vst.msk [vmem:[#allocation11 + $0x8] sm:$0xff] %vm75, %v233
    // Predicated region
    $region26: #{tpu_custom_call.1} parent=1 // pred_check
      _
    $region27: #{tpu_custom_call.1} parent=1 // pred_check_branch
      %237 = sbr.rel (0) target = $region29
    $region28: #{tpu_custom_call.1} parent=1 // pred_region
      %s239 = ssub.s32 256, 256
      %240 = vsyncadd [#allocation4], %s239
      %s241 = sshll.u32 [#allocation8], 4
      %s242 = int_to_ptr.vmem [resolvable:$true] %s241
      %247 = dma.vmem_to_hbm [thread:$0]  %s242, 256, %s3, [#allocation4], 128, 128, 8
    $region29: #{tpu_custom_call.1} parent=1 // pred_fallthru
      _
    // Predicated region
    $region30: #{tpu_custom_call.1} parent=1 // pred_check
      _
    $region31: #{tpu_custom_call.1} parent=1 // pred_check_branch
      %249 = sbr.rel (0) target = $region33
    $region32: #{tpu_custom_call.1} parent=1 // pred_region
      %s251 = ssub.s32 256, 256
      %252 = vsyncadd [#allocation10], %s251
      %s253 = sshll.u32 [#allocation9], 4
      %s254 = int_to_ptr.vmem [resolvable:$true] %s253
      %259 = dma.vmem_to_hbm [thread:$0]  %s254, 256, %s4, [#allocation10], 128, 128, 8
    $region33: #{tpu_custom_call.1} parent=1 // pred_fallthru
      _
    // Predicated region
    $region34: #{tpu_custom_call.1} parent=1 // pred_check
      _
    $region35: #{tpu_custom_call.1} parent=1 // pred_check_branch
      %261 = sbr.rel (0) target = $region37
    $region36: #{tpu_custom_call.1} parent=1 // pred_region
      %s263 = ssub.s32 256, 256
      %264 = vsyncadd [#allocation10], %s263
      %s265 = sshll.u32 [#allocation11], 4
      %s266 = int_to_ptr.vmem [resolvable:$true] %s265
      %271 = dma.vmem_to_hbm [thread:$0]  %s266, 256, %s5, [#allocation10], 128, 128, 8
    $region37: #{tpu_custom_call.1} parent=1 // pred_fallthru
      _
    // Predicated region
    $region38: #{tpu_custom_call.1} parent=1 // pred_check
      _
    $region39: #{tpu_custom_call.1} parent=1 // pred_check_branch
      %273 = sbr.rel (0) target = $region41
    $region40: #{tpu_custom_call.1} parent=1 // pred_region
      %274 = dma.done [#allocation4], 256
    $region41: #{tpu_custom_call.1} parent=1 // pred_fallthru
      _
    // Predicated region
    $region42: #{tpu_custom_call.1} parent=1 // pred_check
      _
    $region43: #{tpu_custom_call.1} parent=1 // pred_check_branch
      %276 = sbr.rel (0) target = $region45
    $region44: #{tpu_custom_call.1} parent=1 // pred_region
      %277 = dma.done [#allocation10], 256
    $region45: #{tpu_custom_call.1} parent=1 // pred_fallthru
      _
    // Predicated region
    $region46: #{tpu_custom_call.1} parent=1 // pred_check
      _
    $region47: #{tpu_custom_call.1} parent=1 // pred_check_branch
      %279 = sbr.rel (0) target = $region49
    $region48: #{tpu_custom_call.1} parent=1 // pred_region
      %280 = dma.done [#allocation10], 256
    $region49: #{tpu_custom_call.1} parent=1 // pred_fallthru
      _
    %281 = vsyncpa [#allocation3], 1
    %282 = vsyncpa [#allocation6], 1
    %283 = vsyncpa [#allocation4], 1
    %284 = vsyncpa [#allocation10], 1

</llo_original>
